<compile_context>
chip_gen: v6e
topology: v6e:2x2x1
jax: 0.10.0
libtpu: 0.0.40
codegen_flags: <defaults>
</compile_context>

<pallas_src>
import jax
import jax.numpy as jnp
from jax.experimental import pallas as pl
from jax.experimental.pallas import tpu as pltpu


def _round_up(n, m):
    return ((n + m - 1) // m) * m


def _box_enc_kernel(x_ref, w1_ref, b1_ref, w2_ref, b2_ref, o_ref):
    # x_ref:  (bb, k)      w1_ref: (k, Hp)    b1_ref: (1, Hp)  [f32]
    # w2_ref: (Hp, Dp)     b2_ref: (1, Dp)    [f32]
    # o_ref:  (bb, Dp)
    x = x_ref[...].astype(w1_ref.dtype)          # in-VMEM cast (VPU, hidden under MXU)
    h = jnp.dot(x, w1_ref[...], preferred_element_type=jnp.float32)
    h = jnp.maximum(h + b1_ref[...], 0.0)        # bias + ReLU in f32
    y = jnp.dot(h.astype(w2_ref.dtype), w2_ref[...],
                preferred_element_type=jnp.float32) + b2_ref[...]
    o_ref[...] = y.astype(o_ref.dtype)


def pad_box_enc_params(w1, b1, w2, b2, *, compute_dtype=jnp.bfloat16):
    """Pad parameters ONCE (lane-align h and d to 128; keep real k).

    bf16 is the recommended compute dtype on v5e/v6e/v7x (native MXU rate,
    half the weight HBM bytes); accumulation stays f32 so biases are kept f32.
    Padding contributes exact zeros to both matmuls.
    """
    k, h = w1.shape
    d = w2.shape[1]
    assert b1.shape == (1, h) and w2.shape == (h, d) and b2.shape == (1, d)
    hp = _round_up(h, 128)
    dp = _round_up(d, 128)
    w1p = jnp.zeros((k, hp), compute_dtype).at[:, :h].set(w1.astype(compute_dtype))
    b1p = jnp.zeros((1, hp), jnp.float32).at[:, :h].set(b1.astype(jnp.float32))
    w2p = jnp.zeros((hp, dp), compute_dtype).at[:h, :d].set(w2.astype(compute_dtype))
    b2p = jnp.zeros((1, dp), jnp.float32).at[:, :d].set(b2.astype(jnp.float32))
    return {"w1": w1p, "b1": b1p, "w2": w2p, "b2": b2p, "k": k, "h": h, "d": d}


def box_enc_forward(x, params, *, block_b=512, out_dtype=None):
    """BoxEnc forward: relu(x @ w1 + b1) @ w2 + b2 via one batched Pallas call.

    x: (B, k) in any float dtype (cast in-kernel to the weights' compute
    dtype).  `params` must come from `pad_box_enc_params`.  The batch is tiled
    with a 1-D "parallel" grid (v7x splits tiles across its 2 TensorCores);
    weights/biases use constant index_maps so they stay VMEM-resident across
    all batch tiles.  Only batch padding happens per call.
    """
    B, k = x.shape
    assert k == params["k"], f"feature dim mismatch: {k} vs {params['k']}"
    w1p, b1p, w2p, b2p = params["w1"], params["b1"], params["w2"], params["b2"]
    d = params["d"]
    hp = w1p.shape[1]
    dp = w2p.shape[1]
    compute_dtype = w1p.dtype
    if out_dtype is None:
        out_dtype = x.dtype

    # Sublane multiple: sub-32-bit dtypes pack 2 rows/sublane -> round to 16.
    min_bytes = min(jnp.dtype(t).itemsize
                    for t in (x.dtype, compute_dtype, out_dtype))
    sub = 16 if min_bytes < 4 else 8

    bb = min(_round_up(block_b, sub), _round_up(B, sub))
    bp = _round_up(B, bb)
    xc = x
    if bp != B:
        xc = jnp.zeros((bp, k), x.dtype).at[:B].set(x)
    grid = (bp // bb,)

    flops = 2 * bp * (k * hp + hp * dp)
    bytes_accessed = (
        xc.size * xc.dtype.itemsize
        + w1p.size * w1p.dtype.itemsize + w2p.size * w2p.dtype.itemsize
        + b1p.size * 4 + b2p.size * 4
        + bp * dp * jnp.dtype(out_dtype).itemsize
    )

    out = pl.pallas_call(
        _box_enc_kernel,
        out_shape=jax.ShapeDtypeStruct((bp, dp), out_dtype),
        grid_spec=pl.GridSpec(
            grid=grid,
            in_specs=[
                pl.BlockSpec((bb, k), lambda i: (i, 0)),    # x: tiled over batch
                pl.BlockSpec((k, hp), lambda i: (0, 0)),    # w1: resident
                pl.BlockSpec((1, hp), lambda i: (0, 0)),    # b1: resident
                pl.BlockSpec((hp, dp), lambda i: (0, 0)),   # w2: resident
                pl.BlockSpec((1, dp), lambda i: (0, 0)),    # b2: resident
            ],
            out_specs=pl.BlockSpec((bb, dp), lambda i: (i, 0)),
        ),
        compiler_params=pltpu.CompilerParams(
            dimension_semantics=("parallel",),
        ),
        cost_estimate=pl.CostEstimate(
            flops=flops, transcendentals=0, bytes_accessed=bytes_accessed),
    )(xc, w1p, b1p, w2p, b2p)

    # Strip batch + lane padding (consumers that accept the (bp, 128) slab can
    # skip this slice and save one small XLA copy).
    return out[:B, :d]


def init_box_enc_params(key, k=54, d=100, h=300, dtype=jnp.float32):
    """Deterministic synthetic init mimicking nn.Linear's uniform(-1/sqrt(fan_in), +)."""
    k1, k2, k3, k4 = jax.random.split(key, 4)
    lim1 = 1.0 / jnp.sqrt(jnp.array(k, dtype))
    lim2 = 1.0 / jnp.sqrt(jnp.array(h, dtype))
    w1 = jax.random.uniform(k1, (k, h), dtype, minval=-lim1, maxval=lim1)
    b1 = jax.random.uniform(k2, (1, h), dtype, minval=-lim1, maxval=lim1)
    w2 = jax.random.uniform(k3, (h, d), dtype, minval=-lim2, maxval=lim2)
    b2 = jax.random.uniform(k4, (1, d), dtype, minval=-lim2, maxval=lim2)
    return w1, b1, w2, b2


if __name__ == "__main__":
    key = jax.random.PRNGKey(0)
    k_dim, d_dim, h_dim = 54, 100, 300
    # Batch of scene-graph boxes per call (amortizes launch + weight DMA).
    batch = 64

    pkey, xkey = jax.random.split(key)
    w1, b1, w2, b2 = init_box_enc_params(pkey, k=k_dim, d=d_dim, h=h_dim)
    x = jax.random.normal(xkey, (batch, k_dim), jnp.float32)

    # Reference in plain JAX (same math as the PyTorch module).
    ref = jnp.maximum(x @ w1 + b1, 0.0) @ w2 + b2

    # f32 compute path (exact vs. reference).
    params_f32 = pad_box_enc_params(w1, b1, w2, b2, compute_dtype=jnp.float32)
    out = jax.block_until_ready(box_enc_forward(x, params_f32))
    assert out.shape == (batch, d_dim)
    assert jnp.allclose(out, ref, atol=1e-4, rtol=1e-4)

    # bf16 compute path (recommended on v5e/v6e/v7x: native MXU rate, half the
    # weight HBM bytes; f32 accumulation + f32 bias/ReLU).
    params_bf16 = pad_box_enc_params(w1, b1, w2, b2, compute_dtype=jnp.bfloat16)
    out_bf16 = jax.block_until_ready(box_enc_forward(x, params_bf16))
    assert out_bf16.shape == (batch, d_dim)
    assert jnp.allclose(out_bf16, ref, atol=5e-2, rtol=5e-2)

    print("KERNEL_OK")
</pallas_src>

<mosaic_0001>
module attributes {stable_mosaic.version = 11 : i64} {
  func.func @_box_enc_kernel(%arg0: i32, %arg1: memref<64x54xf32, #tpu.memory_space<vmem>>, %arg2: memref<54x384xf32, #tpu.memory_space<vmem>>, %arg3: memref<1x384xf32, #tpu.memory_space<vmem>>, %arg4: memref<384x128xf32, #tpu.memory_space<vmem>>, %arg5: memref<1x128xf32, #tpu.memory_space<vmem>>, %arg6: memref<64x128xf32, #tpu.memory_space<vmem>>) attributes {dimension_semantics = [#tpu.dimension_semantics<parallel>], iteration_bounds = array<i64: 1>, scalar_prefetch = 0 : i64, scratch_operands = 0 : i64, tpu.core_type = #tpu.core_type<tc>, window_params = [{transform_indices = @transform_0, window_bounds = array<i64: 64, 54>}, {pipeline_mode = #tpu.pipeline_mode<synchronous>, transform_indices = @transform_1, window_bounds = array<i64: 54, 384>}, {pipeline_mode = #tpu.pipeline_mode<synchronous>, transform_indices = @transform_2, window_bounds = array<i64: 1, 384>}, {pipeline_mode = #tpu.pipeline_mode<synchronous>, transform_indices = @transform_3, window_bounds = array<i64: 384, 128>}, {pipeline_mode = #tpu.pipeline_mode<synchronous>, transform_indices = @transform_4, window_bounds = array<i64: 1, 128>}, {transform_indices = @transform_5, window_bounds = array<i64: 64, 128>}]} {
    %c0 = arith.constant 0 : index
    %c0_0 = arith.constant 0 : index
    %0 = vector.load %arg1[%c0, %c0_0] : memref<64x54xf32, #tpu.memory_space<vmem>>, vector<64x54xf32>
    %c0_1 = arith.constant 0 : index
    %c0_2 = arith.constant 0 : index
    %1 = vector.load %arg2[%c0_1, %c0_2] : memref<54x384xf32, #tpu.memory_space<vmem>>, vector<54x384xf32>
    %cst = arith.constant dense<0.000000e+00> : vector<64x384xf32>
    %2 = tpu.matmul %0, %1, %cst {dimension_numbers = #tpu.dot_dimension_numbers<[1], [0], [0], [1], [0, 0, 1, 1], [], []>} : vector<64x54xf32>, vector<54x384xf32>, vector<64x384xf32> -> vector<64x384xf32>
    %c0_3 = arith.constant 0 : index
    %c0_4 = arith.constant 0 : index
    %3 = vector.load %arg3[%c0_3, %c0_4] : memref<1x384xf32, #tpu.memory_space<vmem>>, vector<1x384xf32>
    %4 = vector.broadcast %3 : vector<1x384xf32> to vector<64x384xf32>
    %5 = arith.addf %2, %4 : vector<64x384xf32>
    %cst_5 = arith.constant 0.000000e+00 : f32
    %6 = vector.broadcast %cst_5 : f32 to vector<64x384xf32>
    %7 = arith.maximumf %5, %6 : vector<64x384xf32>
    %c0_6 = arith.constant 0 : index
    %c0_7 = arith.constant 0 : index
    %8 = vector.load %arg4[%c0_6, %c0_7] : memref<384x128xf32, #tpu.memory_space<vmem>>, vector<384x128xf32>
    %cst_8 = arith.constant dense<0.000000e+00> : vector<64x128xf32>
    %9 = tpu.matmul %7, %8, %cst_8 {dimension_numbers = #tpu.dot_dimension_numbers<[1], [0], [0], [1], [0, 0, 1, 1], [], []>} : vector<64x384xf32>, vector<384x128xf32>, vector<64x128xf32> -> vector<64x128xf32>
    %c0_9 = arith.constant 0 : index
    %c0_10 = arith.constant 0 : index
    %10 = vector.load %arg5[%c0_9, %c0_10] : memref<1x128xf32, #tpu.memory_space<vmem>>, vector<1x128xf32>
    %11 = vector.broadcast %10 : vector<1x128xf32> to vector<64x128xf32>
    %12 = arith.addf %9, %11 : vector<64x128xf32>
    %c0_11 = arith.constant 0 : index
    %c0_12 = arith.constant 0 : index
    %13 = vector.load %arg6[%c0_11, %c0_12] : memref<64x128xf32, #tpu.memory_space<vmem>>, vector<64x128xf32>
    tpu.vector_store %arg6[%c0_11, %c0_12], %12 {strides = array<i32>} : memref<64x128xf32, #tpu.memory_space<vmem>>, vector<64x128xf32>,
    return
  }
  func.func @transform_0(%arg0: i32) -> (i32, i32) {
    %c0_i32 = arith.constant 0 : i32
    %c0_i32_0 = arith.constant 0 : i32
    return %arg0, %c0_i32 : i32, i32
  }
  func.func @transform_1(%arg0: i32) -> (i32, i32) {
    %c0_i32 = arith.constant 0 : i32
    %c0_i32_0 = arith.constant 0 : i32
    %c0_i32_1 = arith.constant 0 : i32
    return %c0_i32, %c0_i32_0 : i32, i32
  }
  func.func @transform_2(%arg0: i32) -> (i32, i32) {
    %c0_i32 = arith.constant 0 : i32
    %c0_i32_0 = arith.constant 0 : i32
    %c0_i32_1 = arith.constant 0 : i32
    return %c0_i32, %c0_i32_0 : i32, i32
  }
  func.func @transform_3(%arg0: i32) -> (i32, i32) {
    %c0_i32 = arith.constant 0 : i32
    %c0_i32_0 = arith.constant 0 : i32
    %c0_i32_1 = arith.constant 0 : i32
    return %c0_i32, %c0_i32_0 : i32, i32
  }
  func.func @transform_4(%arg0: i32) -> (i32, i32) {
    %c0_i32 = arith.constant 0 : i32
    %c0_i32_0 = arith.constant 0 : i32
    %c0_i32_1 = arith.constant 0 : i32
    return %c0_i32, %c0_i32_0 : i32, i32
  }
  func.func @transform_5(%arg0: i32) -> (i32, i32) {
    %c0_i32 = arith.constant 0 : i32
    %c0_i32_0 = arith.constant 0 : i32
    return %arg0, %c0_i32 : i32, i32
  }
}

</mosaic_0001>

<llo_original>
// kernel: tpu_custom_call.1
$region0: #{tpu_custom_call.1}
  #allocation0 [shape = 'u32[]', space=smem, size = 0x4, offset = 0x4, fixed_abs, tag = 'smem constant byte address 0x4 - core index']
  #allocation1 [shape = 'u32[144,128]{1,0:T(1,128)}', space=vmem, size = 0x12000, scoped, tag = 'internal scratch']
  %s0 = inlined_call_operand.vmem [shape: f32[64,54], index: 0, kind: input, shape index: {}]
  %s1 = inlined_call_operand.hbm [shape: f32[54,384], index: 1, kind: input, shape index: {}]
  %s2 = inlined_call_operand.vmem [shape: f32[1,384], index: 2, kind: input, shape index: {}]
  %s3 = inlined_call_operand.hbm [shape: f32[384,128], index: 3, kind: input, shape index: {}]
  %s4 = inlined_call_operand.vmem [shape: f32[1,128], index: 4, kind: input, shape index: {}]
  %s5 = inlined_call_operand.hbm [shape: f32[64,128], index: 5, kind: output, shape index: {}]
  %s6 = sld [smem:[#allocation0]]
  $region38: #{tpu_custom_call.1} parent=0
    _
  %s8 = ssub.s32 1, %s6
  %s9 = scalar_select 0, %s8, %s6
  $region1: #{tpu_custom_call.1} parent=0
    #allocation2 [shape = 'u8[86016]{0}', space=vmem, size = 0x15000, scoped, tag = 'input window, operand 1, single buffered']
    #allocation3 [shape = 's32[1]{0}', space=sflag, size = 0x4, scoped, tag = 'scoped memory for tpu_custom_call.1']
    #allocation4 [shape = 's32[1]{0}', space=sflag, size = 0x4, scoped, tag = 'scoped memory for tpu_custom_call.1']
    #allocation5 [shape = 'u8[196608]{0}', space=vmem, size = 0x30000, scoped, tag = 'input window, operand 3, single buffered']
    #allocation6 [shape = 's32[1]{0}', space=sflag, size = 0x4, scoped, tag = 'scoped memory for tpu_custom_call.1']
    #allocation7 [shape = 'u8[32768]{0}', space=vmem, size = 0x8000, scoped, tag = 'output window, operand 0, single buffered']
    %10 = vsyncpa [#allocation3], 0
    %11 = vsyncpa [#allocation6], 0
    %12 = vsyncpa [#allocation4], 0
    // Predicated region
    $region2: #{tpu_custom_call.1} parent=1 // pred_check
      _
    $region3: #{tpu_custom_call.1} parent=1 // pred_check_branch
      %14 = sbr.rel (0) target = $region5
    $region4: #{tpu_custom_call.1} parent=1 // pred_region
      _
    $region5: #{tpu_custom_call.1} parent=1 // pred_fallthru
      _
    // Predicated region
    $region6: #{tpu_custom_call.1} parent=1 // pred_check
      _
    $region7: #{tpu_custom_call.1} parent=1 // pred_check_branch
      %16 = sbr.rel (0) target = $region9
    $region8: #{tpu_custom_call.1} parent=1 // pred_region
      %s18 = ssub.s32 2688, 2688
      %19 = vsyncadd [#allocation3], %s18
      %s20 = sshll.u32 [#allocation2], 4
      %s21 = int_to_ptr.vmem [resolvable:$true] %s20
      %26 = dma.hbm_to_vmem [thread:$0]  %s1, 2688, %s21, [#allocation3], 384, 384, 24
    $region9: #{tpu_custom_call.1} parent=1 // pred_fallthru
      _
    // Predicated region
    $region10: #{tpu_custom_call.1} parent=1 // pred_check
      _
    $region11: #{tpu_custom_call.1} parent=1 // pred_check_branch
      %28 = sbr.rel (0) target = $region13
    $region12: #{tpu_custom_call.1} parent=1 // pred_region
      _
    $region13: #{tpu_custom_call.1} parent=1 // pred_fallthru
      _
    // Predicated region
    $region14: #{tpu_custom_call.1} parent=1 // pred_check
      _
    $region15: #{tpu_custom_call.1} parent=1 // pred_check_branch
      %30 = sbr.rel (0) target = $region17
    $region16: #{tpu_custom_call.1} parent=1 // pred_region
      %s32 = ssub.s32 6144, 6144
      %33 = vsyncadd [#allocation6], %s32
      %s34 = sshll.u32 [#allocation5], 4
      %s35 = int_to_ptr.vmem [resolvable:$true] %s34
      %40 = dma.hbm_to_vmem [thread:$0]  %s3, 6144, %s35, [#allocation6], 128, 128, 8
    $region17: #{tpu_custom_call.1} parent=1 // pred_fallthru
      _
    // Predicated region
    $region18: #{tpu_custom_call.1} parent=1 // pred_check
      _
    $region19: #{tpu_custom_call.1} parent=1 // pred_check_branch
      %42 = sbr.rel (0) target = $region21
    $region20: #{tpu_custom_call.1} parent=1 // pred_region
      _
    $region21: #{tpu_custom_call.1} parent=1 // pred_fallthru
      _
    // Predicated region
    $region22: #{tpu_custom_call.1} parent=1 // pred_check
      _
    $region23: #{tpu_custom_call.1} parent=1 // pred_check_branch
      %44 = sbr.rel (0) target = $region25
    $region24: #{tpu_custom_call.1} parent=1 // pred_region
      %45 = dma.done [#allocation3], 2688
    $region25: #{tpu_custom_call.1} parent=1 // pred_fallthru
      _
    // Predicated region
    $region26: #{tpu_custom_call.1} parent=1 // pred_check
      _
    $region27: #{tpu_custom_call.1} parent=1 // pred_check_branch
      %47 = sbr.rel (0) target = $region29
    $region28: #{tpu_custom_call.1} parent=1 // pred_region
      %48 = dma.done [#allocation6], 6144
    $region29: #{tpu_custom_call.1} parent=1 // pred_fallthru
      _
    %v49 = vld [vmem:[%s0] sm:$0xff]
    %v50 = vld [vmem:[%s0 + $0x8] sm:$0xff]
    %v51 = vld [vmem:[%s0 + $0x10] sm:$0xff]
    %v52 = vld [vmem:[%s0 + $0x18] sm:$0xff]
    %v53 = vld [vmem:[%s0 + $0x20] sm:$0xff]
    %v54 = vld [vmem:[%s0 + $0x28] sm:$0xff]
    %v55 = vld [vmem:[%s0 + $0x30] sm:$0xff]
    %v56 = vld [vmem:[%s0 + $0x38] sm:$0xff]
    %v57 = vld [vmem:[#allocation2] sm:$0xff]
    %v58 = vld [vmem:[#allocation2 + $0x8] sm:$0xff]
    %v59 = vld [vmem:[#allocation2 + $0x10] sm:$0xff]
    %v60 = vld [vmem:[#allocation2 + $0x18] sm:$0xff]
    %v61 = vld [vmem:[#allocation2 + $0x20] sm:$0xff]
    %v62 = vld [vmem:[#allocation2 + $0x28] sm:$0xff]
    %v63 = vld [vmem:[#allocation2 + $0x30] sm:$0xff]
    %v64 = vld [vmem:[#allocation2 + $0x38] sm:$0xff]
    %v65 = vld [vmem:[#allocation2 + $0x40] sm:$0xff]
    %v66 = vld [vmem:[#allocation2 + $0x48] sm:$0xff]
    %v67 = vld [vmem:[#allocation2 + $0x50] sm:$0xff]
    %v68 = vld [vmem:[#allocation2 + $0x58] sm:$0xff]
    %v69 = vld [vmem:[#allocation2 + $0x60] sm:$0xff]
    %v70 = vld [vmem:[#allocation2 + $0x68] sm:$0xff]
    %v71 = vld [vmem:[#allocation2 + $0x70] sm:$0xff]
    %v72 = vld [vmem:[#allocation2 + $0x78] sm:$0xff]
    %v73 = vld [vmem:[#allocation2 + $0x80] sm:$0xff]
    %v74 = vld [vmem:[#allocation2 + $0x88] sm:$0xff]
    %v75 = vld [vmem:[#allocation2 + $0x90] sm:$0x3f]
    %v76 = vld [vmem:[#allocation2 + $0x98] sm:$0x3f]
    %v77 = vld [vmem:[#allocation2 + $0xa0] sm:$0x3f]
    %v78 = vld [vmem:[%s2] sm:$0x7]
    %v80 = vlaneseq
    %v81 = vshrl.u32 %v80, 7
    %v82 = vsub.s32 0, %v81
    %v83 = vrot.slane %v78, %v82
    %v84 = vlaneseq
    %v85 = vshrl.u32 %v84, 7
    %v86 = vsub.s32 1, %v85
    %v87 = vrot.slane %v78, %v86
    %v88 = vlaneseq
    %v89 = vshrl.u32 %v88, 7
    %v90 = vsub.s32 2, %v89
    %v91 = vrot.slane %v78, %v90
    %vm95 = vcmask 441344
    %v97 = vsel %vm95, %v49, 0
    %v100 = vsel %vm95, %v50, 0
    %v103 = vsel %vm95, %v51, 0
    %v106 = vsel %vm95, %v52, 0
    %v109 = vsel %vm95, %v53, 0
    %v112 = vsel %vm95, %v54, 0
    %v115 = vsel %vm95, %v55, 0
    %v118 = vsel %vm95, %v56, 0
    %vm120 = vcmask 1045504
    %v122 = vsel %vm120, %v75, 0
    %v125 = vsel %vm120, %v76, 0
    %v128 = vsel %vm120, %v77, 0
    %130 = vmatprep.subr.mxu0 0.0
    %131 = vmatpush1.msra.mxu0 0.0
    %132 = vmatprep.subr.mxu0 0.0
    %133 = vmatpush1.msra.mxu0 0.0
    %134 = vmatprep.subr.mxu0 0.0
    %135 = vmatpush1.msra.mxu0 0.0
    %136 = vmatprep.subr.mxu0 0.0
    %137 = vmatpush1.msra.mxu0 0.0
    %138 = vmatprep.subr.mxu0 0.0
    %139 = vmatpush1.msra.mxu0 0.0
    %140 = vmatprep.subr.mxu0 0.0
    %141 = vmatpush1.msra.mxu0 0.0
    %142 = vmatprep.subr.mxu0 0.0
    %143 = vmatpush1.msra.mxu0 0.0
    %144 = vmatprep.subr.mxu0 0.0
    %145 = vmatpush1.msra.mxu0 0.0
    %146 = vmatprep.subr.mxu0 0.0
    %147 = vmatpush1.msra.mxu0 0.0
    %148 = vmatprep.subr.mxu0 %v125
    %149 = vmatpush1.msra.mxu0 %v122
    %150 = vmatprep.subr.mxu0 %v73
    %151 = vmatpush1.msra.mxu0 %v72
    %152 = vmatprep.subr.mxu0 %v70
    %153 = vmatpush1.msra.mxu0 %v69
    %154 = vmatprep.subr.mxu0 %v67
    %155 = vmatpush1.msra.mxu0 %v66
    %156 = vmatprep.subr.mxu0 %v64
    %157 = vmatpush1.msra.mxu0 %v63
    %158 = vmatprep.subr.mxu0 %v61
    %159 = vmatpush1.msra.mxu0 %v60
    %160 = vmatprep.subr.mxu0 %v58
    %161 = vmatpush1.msra.mxu0 %v57
    %162 = vmatprep.subr.mxu0 0.0
    %163 = vmatpush2.msra.mxu0 0.0
    %164 = vmatprep.subr.mxu0 0.0
    %165 = vmatpush2.msra.mxu0 0.0
    %166 = vmatprep.subr.mxu0 0.0
    %167 = vmatpush2.msra.mxu0 0.0
    %168 = vmatprep.subr.mxu0 0.0
    %169 = vmatpush2.msra.mxu0 0.0
    %170 = vmatprep.subr.mxu0 0.0
    %171 = vmatpush2.msra.mxu0 0.0
    %172 = vmatprep.subr.mxu0 0.0
    %173 = vmatpush2.msra.mxu0 0.0
    %174 = vmatprep.subr.mxu0 0.0
    %175 = vmatpush2.msra.mxu0 0.0
    %176 = vmatprep.subr.mxu0 0.0
    %177 = vmatpush2.msra.mxu0 0.0
    %178 = vmatprep.subr.mxu0 0.0
    %179 = vmatpush2.msra.mxu0 0.0
    %180 = vmatprep.subr.mxu0 0.0
    %181 = vmatpush2.msra.mxu0 0.0
    %182 = vmatprep.subr.mxu0 0.0
    %183 = vmatpush2.msra.mxu0 0.0
    %184 = vmatprep.subr.mxu0 0.0
    %185 = vmatpush2.msra.mxu0 0.0
    %186 = vmatprep.subr.mxu0 0.0
    %187 = vmatpush2.msra.mxu0 0.0
    %188 = vmatprep.subr.mxu0 0.0
    %189 = vmatpush2.msra.mxu0 0.0
    %190 = vmatprep.subr.mxu0 0.0
    %191 = vmatpush2.msra.mxu0 0.0
    %192 = vmatprep.subr.mxu0 0.0
    %193 = vmatpush2.msra.mxu0 0.0
    %194 = vmatprep.mubr.f32.mxu0 0.0
    %195 = vmatmul.mubr.f32.gmra.mxu0 %v97
    %v196 = vpop.f32.mrf.mxu0
    %v197 = vadd.f32 %v83, %v196
    %v198 = vpop.f32.mrf.mxu0
    %v199 = vadd.f32 %v87, %v198
    %200 = vmatprep.mubr.f32.mxu0 0.0
    %201 = vmatmul.mubr.f32.gmra.mxu0 %v100
    %v202 = vpop.f32.mrf.mxu0
    %v203 = vadd.f32 %v83, %v202
    %v204 = vpop.f32.mrf.mxu0
    %v205 = vadd.f32 %v87, %v204
    %206 = vmatprep.mubr.f32.mxu0 0.0
    %207 = vmatmul.mubr.f32.gmra.mxu0 %v103
    %v208 = vpop.f32.mrf.mxu0
    %v209 = vadd.f32 %v83, %v208
    %v210 = vpop.f32.mrf.mxu0
    %v211 = vadd.f32 %v87, %v210
    %212 = vmatprep.mubr.f32.mxu0 0.0
    %213 = vmatmul.mubr.f32.gmra.mxu0 %v106
    %v214 = vpop.f32.mrf.mxu0
    %v215 = vadd.f32 %v83, %v214
    %v216 = vpop.f32.mrf.mxu0
    %v217 = vadd.f32 %v87, %v216
    %218 = vmatprep.mubr.f32.mxu0 0.0
    %219 = vmatmul.mubr.f32.gmra.mxu0 %v109
    %v220 = vpop.f32.mrf.mxu0
    %v221 = vadd.f32 %v83, %v220
    %v222 = vpop.f32.mrf.mxu0
    %v223 = vadd.f32 %v87, %v222
    %224 = vmatprep.mubr.f32.mxu0 0.0
    %225 = vmatmul.mubr.f32.gmra.mxu0 %v112
    %v226 = vpop.f32.mrf.mxu0
    %v227 = vadd.f32 %v83, %v226
    %v228 = vpop.f32.mrf.mxu0
    %v229 = vadd.f32 %v87, %v228
    %230 = vmatprep.mubr.f32.mxu0 0.0
    %231 = vmatmul.mubr.f32.gmra.mxu0 %v115
    %v232 = vpop.f32.mrf.mxu0
    %v233 = vadd.f32 %v83, %v232
    %v234 = vpop.f32.mrf.mxu0
    %v235 = vadd.f32 %v87, %v234
    %236 = vmatprep.mubr.f32.mxu0 0.0
    %237 = vmatmul.mubr.f32.gmra.mxu0 %v118
    %v238 = vpop.f32.mrf.mxu0
    %v239 = vadd.f32 %v83, %v238
    %v240 = vpop.f32.mrf.mxu0
    %v241 = vadd.f32 %v87, %v240
    %242 = vdwg.mxu0
    %243 = vmatprep.subr.mxu0 0.0
    %244 = vmatpush1.msra.mxu0 0.0
    %245 = vmatprep.subr.mxu0 0.0
    %246 = vmatpush1.msra.mxu0 0.0
    %247 = vmatprep.subr.mxu0 0.0
    %248 = vmatpush1.msra.mxu0 0.0
    %249 = vmatprep.subr.mxu0 0.0
    %250 = vmatpush1.msra.mxu0 0.0
    %251 = vmatprep.subr.mxu0 0.0
    %252 = vmatpush1.msra.mxu0 0.0
    %253 = vmatprep.subr.mxu0 0.0
    %254 = vmatpush1.msra.mxu0 0.0
    %255 = vmatprep.subr.mxu0 0.0
    %256 = vmatpush1.msra.mxu0 0.0
    %257 = vmatprep.subr.mxu0 0.0
    %258 = vmatpush1.msra.mxu0 0.0
    %259 = vmatprep.subr.mxu0 0.0
    %260 = vmatpush1.msra.mxu0 0.0
    %261 = vmatprep.subr.mxu0 0.0
    %262 = vmatpush1.msra.mxu0 %v128
    %263 = vmatprep.subr.mxu0 0.0
    %264 = vmatpush1.msra.mxu0 %v74
    %265 = vmatprep.subr.mxu0 0.0
    %266 = vmatpush1.msra.mxu0 %v71
    %267 = vmatprep.subr.mxu0 0.0
    %268 = vmatpush1.msra.mxu0 %v68
    %269 = vmatprep.subr.mxu0 0.0
    %270 = vmatpush1.msra.mxu0 %v65
    %271 = vmatprep.subr.mxu0 0.0
    %272 = vmatpush1.msra.mxu0 %v62
    %273 = vmatprep.subr.mxu0 0.0
    %274 = vmatpush1.msra.mxu0 %v59
    %275 = vmatprep.subr.mxu0 0.0
    %276 = vmatpush2.msra.mxu0 0.0
    %277 = vmatprep.subr.mxu0 0.0
    %278 = vmatpush2.msra.mxu0 0.0
    %279 = vmatprep.subr.mxu0 0.0
    %280 = vmatpush2.msra.mxu0 0.0
    %281 = vmatprep.subr.mxu0 0.0
    %282 = vmatpush2.msra.mxu0 0.0
    %283 = vmatprep.subr.mxu0 0.0
    %284 = vmatpush2.msra.mxu0 0.0
    %285 = vmatprep.subr.mxu0 0.0
    %286 = vmatpush2.msra.mxu0 0.0
    %287 = vmatprep.subr.mxu0 0.0
    %288 = vmatpush2.msra.mxu0 0.0
    %289 = vmatprep.subr.mxu0 0.0
    %290 = vmatpush2.msra.mxu0 0.0
    %291 = vmatprep.subr.mxu0 0.0
    %292 = vmatpush2.msra.mxu0 0.0
    %293 = vmatprep.subr.mxu0 0.0
    %294 = vmatpush2.msra.mxu0 0.0
    %295 = vmatprep.subr.mxu0 0.0
    %296 = vmatpush2.msra.mxu0 0.0
    %297 = vmatprep.subr.mxu0 0.0
    %298 = vmatpush2.msra.mxu0 0.0
    %299 = vmatprep.subr.mxu0 0.0
    %300 = vmatpush2.msra.mxu0 0.0
    %301 = vmatprep.subr.mxu0 0.0
    %302 = vmatpush2.msra.mxu0 0.0
    %303 = vmatprep.subr.mxu0 0.0
    %304 = vmatpush2.msra.mxu0 0.0
    %305 = vmatprep.subr.mxu0 0.0
    %306 = vmatpush2.msra.mxu0 0.0
    %307 = vmatprep.mubr.f32.mxu0 0.0
    %308 = vmatmul.mubr.f32.gmra.mxu0 %v97
    %v309 = vpop.f32.mrf.mxu0
    %v310 = vadd.f32 %v91, %v309
    %v311 = vpop.f32.mrf.mxu0
    %312 = vmatprep.mubr.f32.mxu0 0.0
    %313 = vmatmul.mubr.f32.gmra.mxu0 %v100
    %v314 = vpop.f32.mrf.mxu0
    %v315 = vadd.f32 %v91, %v314
    %v316 = vpop.f32.mrf.mxu0
    %317 = vmatprep.mubr.f32.mxu0 0.0
    %318 = vmatmul.mubr.f32.gmra.mxu0 %v103
    %v319 = vpop.f32.mrf.mxu0
    %v320 = vadd.f32 %v91, %v319
    %v321 = vpop.f32.mrf.mxu0
    %322 = vmatprep.mubr.f32.mxu0 0.0
    %323 = vmatmul.mubr.f32.gmra.mxu0 %v106
    %v324 = vpop.f32.mrf.mxu0
    %v325 = vadd.f32 %v91, %v324
    %v326 = vpop.f32.mrf.mxu0
    %327 = vmatprep.mubr.f32.mxu0 0.0
    %328 = vmatmul.mubr.f32.gmra.mxu0 %v109
    %v329 = vpop.f32.mrf.mxu0
    %v330 = vadd.f32 %v91, %v329
    %v331 = vpop.f32.mrf.mxu0
    %332 = vmatprep.mubr.f32.mxu0 0.0
    %333 = vmatmul.mubr.f32.gmra.mxu0 %v112
    %v334 = vpop.f32.mrf.mxu0
    %v335 = vadd.f32 %v91, %v334
    %v336 = vpop.f32.mrf.mxu0
    %337 = vmatprep.mubr.f32.mxu0 0.0
    %338 = vmatmul.mubr.f32.gmra.mxu0 %v115
    %v339 = vpop.f32.mrf.mxu0
    %v340 = vadd.f32 %v91, %v339
    %v341 = vpop.f32.mrf.mxu0
    %342 = vmatprep.mubr.f32.mxu0 0.0
    %343 = vmatmul.mubr.f32.gmra.mxu0 %v118
    %v344 = vpop.f32.mrf.mxu0
    %v345 = vadd.f32 %v91, %v344
    %v346 = vpop.f32.mrf.mxu0
    %347 = vdwg.mxu0
    %v348 = vmax.f32 %v197, 0.0
    %v349 = vmax.f32 %v199, 0.0
    %v350 = vmax.f32 %v310, 0.0
    %v351 = vmax.f32 %v203, 0.0
    %v352 = vmax.f32 %v205, 0.0
    %v353 = vmax.f32 %v315, 0.0
    %v354 = vmax.f32 %v209, 0.0
    %v355 = vmax.f32 %v211, 0.0
    %v356 = vmax.f32 %v320, 0.0
    %v357 = vmax.f32 %v215, 0.0
    %v358 = vmax.f32 %v217, 0.0
    %v359 = vmax.f32 %v325, 0.0
    %v360 = vmax.f32 %v221, 0.0
    %v361 = vmax.f32 %v223, 0.0
    %v362 = vmax.f32 %v330, 0.0
    %v363 = vmax.f32 %v227, 0.0
    %v364 = vmax.f32 %v229, 0.0
    %v365 = vmax.f32 %v335, 0.0
    %v366 = vmax.f32 %v233, 0.0
    %v367 = vmax.f32 %v235, 0.0
    %v368 = vmax.f32 %v340, 0.0
    %v369 = vmax.f32 %v239, 0.0
    %v370 = vmax.f32 %v241, 0.0
    %v371 = vmax.f32 %v345, 0.0
    %v372 = vld [vmem:[#allocation5] sm:$0xff]
    %v373 = vld [vmem:[#allocation5 + $0x8] sm:$0xff]
    %v374 = vld [vmem:[#allocation5 + $0x10] sm:$0xff]
    %v375 = vld [vmem:[#allocation5 + $0x18] sm:$0xff]
    %v376 = vld [vmem:[#allocation5 + $0x20] sm:$0xff]
    %v377 = vld [vmem:[#allocation5 + $0x28] sm:$0xff]
    %v378 = vld [vmem:[#allocation5 + $0x30] sm:$0xff]
    %v379 = vld [vmem:[#allocation5 + $0x38] sm:$0xff]
    %v380 = vld [vmem:[#allocation5 + $0x40] sm:$0xff]
    %v381 = vld [vmem:[#allocation5 + $0x48] sm:$0xff]
    %v382 = vld [vmem:[#allocation5 + $0x50] sm:$0xff]
    %v383 = vld [vmem:[#allocation5 + $0x58] sm:$0xff]
    %v384 = vld [vmem:[#allocation5 + $0x60] sm:$0xff]
    %v385 = vld [vmem:[#allocation5 + $0x68] sm:$0xff]
    %v386 = vld [vmem:[#allocation5 + $0x70] sm:$0xff]
    %v387 = vld [vmem:[#allocation5 + $0x78] sm:$0xff]
    %v388 = vld [vmem:[#allocation5 + $0x80] sm:$0xff]
    %v389 = vld [vmem:[#allocation5 + $0x88] sm:$0xff]
    %v390 = vld [vmem:[#allocation5 + $0x90] sm:$0xff]
    %v391 = vld [vmem:[#allocation5 + $0x98] sm:$0xff]
    %v392 = vld [vmem:[#allocation5 + $0xa0] sm:$0xff]
    %v393 = vld [vmem:[#allocation5 + $0xa8] sm:$0xff]
    %v394 = vld [vmem:[#allocation5 + $0xb0] sm:$0xff]
    %v395 = vld [vmem:[#allocation5 + $0xb8] sm:$0xff]
    %v396 = vld [vmem:[#allocation5 + $0xc0] sm:$0xff]
    %v397 = vld [vmem:[#allocation5 + $0xc8] sm:$0xff]
    %v398 = vld [vmem:[#allocation5 + $0xd0] sm:$0xff]
    %v399 = vld [vmem:[#allocation5 + $0xd8] sm:$0xff]
    %v400 = vld [vmem:[#allocation5 + $0xe0] sm:$0xff]
    %v401 = vld [vmem:[#allocation5 + $0xe8] sm:$0xff]
    %v402 = vld [vmem:[#allocation5 + $0xf0] sm:$0xff]
    %v403 = vld [vmem:[#allocation5 + $0xf8] sm:$0xff]
    %v404 = vld [vmem:[#allocation5 + $0x100] sm:$0xff]
    %v405 = vld [vmem:[#allocation5 + $0x108] sm:$0xff]
    %v406 = vld [vmem:[#allocation5 + $0x110] sm:$0xff]
    %v407 = vld [vmem:[#allocation5 + $0x118] sm:$0xff]
    %v408 = vld [vmem:[#allocation5 + $0x120] sm:$0xff]
    %v409 = vld [vmem:[#allocation5 + $0x128] sm:$0xff]
    %v410 = vld [vmem:[#allocation5 + $0x130] sm:$0xff]
    %v411 = vld [vmem:[#allocation5 + $0x138] sm:$0xff]
    %v412 = vld [vmem:[#allocation5 + $0x140] sm:$0xff]
    %v413 = vld [vmem:[#allocation5 + $0x148] sm:$0xff]
    %v414 = vld [vmem:[#allocation5 + $0x150] sm:$0xff]
    %v415 = vld [vmem:[#allocation5 + $0x158] sm:$0xff]
    %v416 = vld [vmem:[#allocation5 + $0x160] sm:$0xff]
    %v417 = vld [vmem:[#allocation5 + $0x168] sm:$0xff]
    %v418 = vld [vmem:[#allocation5 + $0x170] sm:$0xff]
    %v419 = vld [vmem:[#allocation5 + $0x178] sm:$0xff]
    %v420 = vld [vmem:[%s4] sm:$0x1]
    %v422 = vlaneseq
    %v423 = vshrl.u32 %v422, 7
    %v424 = vsub.s32 0, %v423
    %v425 = vrot.slane %v420, %v424
    %427 = vmatprep.subr.mxu0 0.0
    %428 = vmatpush1.msra.mxu0 %v387
    %429 = vmatprep.subr.mxu0 0.0
    %430 = vmatpush1.msra.mxu0 %v386
    %431 = vmatprep.subr.mxu0 0.0
    %432 = vmatpush1.msra.mxu0 %v385
    %433 = vmatprep.subr.mxu0 0.0
    %434 = vmatpush1.msra.mxu0 %v384
    %435 = vmatprep.subr.mxu0 0.0
    %436 = vmatpush1.msra.mxu0 %v383
    %437 = vmatprep.subr.mxu0 0.0
    %438 = vmatpush1.msra.mxu0 %v382
    %439 = vmatprep.subr.mxu0 0.0
    %440 = vmatpush1.msra.mxu0 %v381
    %441 = vmatprep.subr.mxu0 0.0
    %442 = vmatpush1.msra.mxu0 %v380
    %443 = vmatprep.subr.mxu0 0.0
    %444 = vmatpush1.msra.mxu0 %v379
    %445 = vmatprep.subr.mxu0 0.0
    %446 = vmatpush1.msra.mxu0 %v378
    %447 = vmatprep.subr.mxu0 0.0
    %448 = vmatpush1.msra.mxu0 %v377
    %449 = vmatprep.subr.mxu0 0.0
    %450 = vmatpush1.msra.mxu0 %v376
    %451 = vmatprep.subr.mxu0 0.0
    %452 = vmatpush1.msra.mxu0 %v375
    %453 = vmatprep.subr.mxu0 0.0
    %454 = vmatpush1.msra.mxu0 %v374
    %455 = vmatprep.subr.mxu0 0.0
    %456 = vmatpush1.msra.mxu0 %v373
    %457 = vmatprep.subr.mxu0 0.0
    %458 = vmatpush1.msra.mxu0 %v372
    %459 = vmatprep.subr.mxu0 0.0
    %460 = vmatpush2.msra.mxu0 %v403
    %461 = vmatprep.subr.mxu0 0.0
    %462 = vmatpush2.msra.mxu0 %v402
    %463 = vmatprep.subr.mxu0 0.0
    %464 = vmatpush2.msra.mxu0 %v401
    %465 = vmatprep.subr.mxu0 0.0
    %466 = vmatpush2.msra.mxu0 %v400
    %467 = vmatprep.subr.mxu0 0.0
    %468 = vmatpush2.msra.mxu0 %v399
    %469 = vmatprep.subr.mxu0 0.0
    %470 = vmatpush2.msra.mxu0 %v398
    %471 = vmatprep.subr.mxu0 0.0
    %472 = vmatpush2.msra.mxu0 %v397
    %473 = vmatprep.subr.mxu0 0.0
    %474 = vmatpush2.msra.mxu0 %v396
    %475 = vmatprep.subr.mxu0 0.0
    %476 = vmatpush2.msra.mxu0 %v395
    %477 = vmatprep.subr.mxu0 0.0
    %478 = vmatpush2.msra.mxu0 %v394
    %479 = vmatprep.subr.mxu0 0.0
    %480 = vmatpush2.msra.mxu0 %v393
    %481 = vmatprep.subr.mxu0 0.0
    %482 = vmatpush2.msra.mxu0 %v392
    %483 = vmatprep.subr.mxu0 0.0
    %484 = vmatpush2.msra.mxu0 %v391
    %485 = vmatprep.subr.mxu0 0.0
    %486 = vmatpush2.msra.mxu0 %v390
    %487 = vmatprep.subr.mxu0 0.0
    %488 = vmatpush2.msra.mxu0 %v389
    %489 = vmatprep.subr.mxu0 0.0
    %490 = vmatpush2.msra.mxu0 %v388
    %491 = vmatprep.mubr.f32.mxu0 %v349
    %492 = vmatmul.mubr.f32.gmra.mxu0 %v348
    %v493 = vpop.f32.mrf.mxu0
    %v494 = vadd.f32 %v425, %v493
    %v495 = vpop.f32.mrf.mxu0
    %496 = vmatprep.mubr.f32.mxu0 %v352
    %497 = vmatmul.mubr.f32.gmra.mxu0 %v351
    %v498 = vpop.f32.mrf.mxu0
    %v499 = vadd.f32 %v425, %v498
    %v500 = vpop.f32.mrf.mxu0
    %501 = vmatprep.mubr.f32.mxu0 %v355
    %502 = vmatmul.mubr.f32.gmra.mxu0 %v354
    %v503 = vpop.f32.mrf.mxu0
    %v504 = vadd.f32 %v425, %v503
    %v505 = vpop.f32.mrf.mxu0
    %506 = vmatprep.mubr.f32.mxu0 %v358
    %507 = vmatmul.mubr.f32.gmra.mxu0 %v357
    %v508 = vpop.f32.mrf.mxu0
    %v509 = vadd.f32 %v425, %v508
    %v510 = vpop.f32.mrf.mxu0
    %511 = vmatprep.mubr.f32.mxu0 %v361
    %512 = vmatmul.mubr.f32.gmra.mxu0 %v360
    %v513 = vpop.f32.mrf.mxu0
    %v514 = vadd.f32 %v425, %v513
    %v515 = vpop.f32.mrf.mxu0
    %516 = vmatprep.mubr.f32.mxu0 %v364
    %517 = vmatmul.mubr.f32.gmra.mxu0 %v363
    %v518 = vpop.f32.mrf.mxu0
    %v519 = vadd.f32 %v425, %v518
    %v520 = vpop.f32.mrf.mxu0
    %521 = vmatprep.mubr.f32.mxu0 %v367
    %522 = vmatmul.mubr.f32.gmra.mxu0 %v366
    %v523 = vpop.f32.mrf.mxu0
    %v524 = vadd.f32 %v425, %v523
    %v525 = vpop.f32.mrf.mxu0
    %526 = vmatprep.mubr.f32.mxu0 %v370
    %527 = vmatmul.mubr.f32.gmra.mxu0 %v369
    %v528 = vpop.f32.mrf.mxu0
    %v529 = vadd.f32 %v425, %v528
    %v530 = vpop.f32.mrf.mxu0
    %531 = vdwg.mxu0
    %532 = vmatprep.subr.mxu0 0.0
    %533 = vmatpush1.msra.mxu0 %v419
    %534 = vmatprep.subr.mxu0 0.0
    %535 = vmatpush1.msra.mxu0 %v418
    %536 = vmatprep.subr.mxu0 0.0
    %537 = vmatpush1.msra.mxu0 %v417
    %538 = vmatprep.subr.mxu0 0.0
    %539 = vmatpush1.msra.mxu0 %v416
    %540 = vmatprep.subr.mxu0 0.0
    %541 = vmatpush1.msra.mxu0 %v415
    %542 = vmatprep.subr.mxu0 0.0
    %543 = vmatpush1.msra.mxu0 %v414
    %544 = vmatprep.subr.mxu0 0.0
    %545 = vmatpush1.msra.mxu0 %v413
    %546 = vmatprep.subr.mxu0 0.0
    %547 = vmatpush1.msra.mxu0 %v412
    %548 = vmatprep.subr.mxu0 0.0
    %549 = vmatpush1.msra.mxu0 %v411
    %550 = vmatprep.subr.mxu0 0.0
    %551 = vmatpush1.msra.mxu0 %v410
    %552 = vmatprep.subr.mxu0 0.0
    %553 = vmatpush1.msra.mxu0 %v409
    %554 = vmatprep.subr.mxu0 0.0
    %555 = vmatpush1.msra.mxu0 %v408
    %556 = vmatprep.subr.mxu0 0.0
    %557 = vmatpush1.msra.mxu0 %v407
    %558 = vmatprep.subr.mxu0 0.0
    %559 = vmatpush1.msra.mxu0 %v406
    %560 = vmatprep.subr.mxu0 0.0
    %561 = vmatpush1.msra.mxu0 %v405
    %562 = vmatprep.subr.mxu0 0.0
    %563 = vmatpush1.msra.mxu0 %v404
    %564 = vmatprep.subr.mxu0 0.0
    %565 = vmatpush2.msra.mxu0 0.0
    %566 = vmatprep.subr.mxu0 0.0
    %567 = vmatpush2.msra.mxu0 0.0
    %568 = vmatprep.subr.mxu0 0.0
    %569 = vmatpush2.msra.mxu0 0.0
    %570 = vmatprep.subr.mxu0 0.0
    %571 = vmatpush2.msra.mxu0 0.0
    %572 = vmatprep.subr.mxu0 0.0
    %573 = vmatpush2.msra.mxu0 0.0
    %574 = vmatprep.subr.mxu0 0.0
    %575 = vmatpush2.msra.mxu0 0.0
    %576 = vmatprep.subr.mxu0 0.0
    %577 = vmatpush2.msra.mxu0 0.0
    %578 = vmatprep.subr.mxu0 0.0
    %579 = vmatpush2.msra.mxu0 0.0
    %580 = vmatprep.subr.mxu0 0.0
    %581 = vmatpush2.msra.mxu0 0.0
    %582 = vmatprep.subr.mxu0 0.0
    %583 = vmatpush2.msra.mxu0 0.0
    %584 = vmatprep.subr.mxu0 0.0
    %585 = vmatpush2.msra.mxu0 0.0
    %586 = vmatprep.subr.mxu0 0.0
    %587 = vmatpush2.msra.mxu0 0.0
    %588 = vmatprep.subr.mxu0 0.0
    %589 = vmatpush2.msra.mxu0 0.0
    %590 = vmatprep.subr.mxu0 0.0
    %591 = vmatpush2.msra.mxu0 0.0
    %592 = vmatprep.subr.mxu0 0.0
    %593 = vmatpush2.msra.mxu0 0.0
    %594 = vmatprep.subr.mxu0 0.0
    %595 = vmatpush2.msra.mxu0 0.0
    %596 = vmatprep.mubr.f32.mxu0 0.0
    %597 = vmatmul.mubr.f32.gmra.mxu0 %v350
    %v598 = vpop.f32.mrf.mxu0
    %v599 = vadd.f32 %v494, %v598
    %v600 = vpop.f32.mrf.mxu0
    %601 = vmatprep.mubr.f32.mxu0 0.0
    %602 = vmatmul.mubr.f32.gmra.mxu0 %v353
    %v603 = vpop.f32.mrf.mxu0
    %v604 = vadd.f32 %v499, %v603
    %v605 = vpop.f32.mrf.mxu0
    %606 = vmatprep.mubr.f32.mxu0 0.0
    %607 = vmatmul.mubr.f32.gmra.mxu0 %v356
    %v608 = vpop.f32.mrf.mxu0
    %v609 = vadd.f32 %v504, %v608
    %v610 = vpop.f32.mrf.mxu0
    %611 = vmatprep.mubr.f32.mxu0 0.0
    %612 = vmatmul.mubr.f32.gmra.mxu0 %v359
    %v613 = vpop.f32.mrf.mxu0
    %v614 = vadd.f32 %v509, %v613
    %v615 = vpop.f32.mrf.mxu0
    %616 = vmatprep.mubr.f32.mxu0 0.0
    %617 = vmatmul.mubr.f32.gmra.mxu0 %v362
    %v618 = vpop.f32.mrf.mxu0
    %v619 = vadd.f32 %v514, %v618
    %v620 = vpop.f32.mrf.mxu0
    %621 = vmatprep.mubr.f32.mxu0 0.0
    %622 = vmatmul.mubr.f32.gmra.mxu0 %v365
    %v623 = vpop.f32.mrf.mxu0
    %v624 = vadd.f32 %v519, %v623
    %v625 = vpop.f32.mrf.mxu0
    %626 = vmatprep.mubr.f32.mxu0 0.0
    %627 = vmatmul.mubr.f32.gmra.mxu0 %v368
    %v628 = vpop.f32.mrf.mxu0
    %v629 = vadd.f32 %v524, %v628
    %v630 = vpop.f32.mrf.mxu0
    %631 = vmatprep.mubr.f32.mxu0 0.0
    %632 = vmatmul.mubr.f32.gmra.mxu0 %v371
    %v633 = vpop.f32.mrf.mxu0
    %v634 = vadd.f32 %v529, %v633
    %v635 = vpop.f32.mrf.mxu0
    %636 = vdwg.mxu0
    %637 = vst [vmem:[#allocation7] sm:$0xff] %v599
    %638 = vst [vmem:[#allocation7 + $0x8] sm:$0xff] %v604
    %639 = vst [vmem:[#allocation7 + $0x10] sm:$0xff] %v609
    %640 = vst [vmem:[#allocation7 + $0x18] sm:$0xff] %v614
    %641 = vst [vmem:[#allocation7 + $0x20] sm:$0xff] %v619
    %642 = vst [vmem:[#allocation7 + $0x28] sm:$0xff] %v624
    %643 = vst [vmem:[#allocation7 + $0x30] sm:$0xff] %v629
    %644 = vst [vmem:[#allocation7 + $0x38] sm:$0xff] %v634
    // Predicated region
    $region30: #{tpu_custom_call.1} parent=1 // pred_check
      _
    $region31: #{tpu_custom_call.1} parent=1 // pred_check_branch
      %646 = sbr.rel (0) target = $region33
    $region32: #{tpu_custom_call.1} parent=1 // pred_region
      %s648 = ssub.s32 1024, 1024
      %649 = vsyncadd [#allocation4], %s648
      %s650 = sshll.u32 [#allocation7], 4
      %s651 = int_to_ptr.vmem [resolvable:$true] %s650
      %656 = dma.vmem_to_hbm [thread:$0]  %s651, 1024, %s5, [#allocation4], 128, 128, 8
    $region33: #{tpu_custom_call.1} parent=1 // pred_fallthru
      _
    // Predicated region
    $region34: #{tpu_custom_call.1} parent=1 // pred_check
      _
    $region35: #{tpu_custom_call.1} parent=1 // pred_check_branch
      %658 = sbr.rel (0) target = $region37
    $region36: #{tpu_custom_call.1} parent=1 // pred_region
      %659 = dma.done [#allocation4], 1024
    $region37: #{tpu_custom_call.1} parent=1 // pred_fallthru
      _
    %660 = vsyncpa [#allocation3], 1
    %661 = vsyncpa [#allocation6], 1
    %662 = vsyncpa [#allocation4], 1

</llo_original>
